<compile_context>
chip_gen: v7x
topology: tpu7x:2x2x1
jax: 0.10.0
libtpu: 0.0.40
codegen_flags: <defaults>
</compile_context>

<pallas_src>
import functools
import math

import jax
import jax.numpy as jnp
from jax.experimental import pallas as pl
from jax.experimental.pallas import tpu as pltpu


def _fuse_kernel(u_ref, p_ref, t_ref, wu_ref, wp_ref, wt_ref, b_ref, out_ref,
                 *, negative_slope):
    # u/p/t: (block_n, D_j); w_j: (D_j, E); b: (1, E); out: (block_n, E)
    acc = jnp.dot(u_ref[...].astype(jnp.float32), wu_ref[...].astype(jnp.float32),
                  preferred_element_type=jnp.float32)
    acc = acc + jnp.dot(p_ref[...].astype(jnp.float32), wp_ref[...].astype(jnp.float32),
                        preferred_element_type=jnp.float32)
    acc = acc + jnp.dot(t_ref[...].astype(jnp.float32), wt_ref[...].astype(jnp.float32),
                        preferred_element_type=jnp.float32)
    acc = acc + b_ref[...].astype(jnp.float32)
    # LeakyReLU(0.2) on the VPU; cast only at the final store.
    out_ref[...] = jnp.where(acc >= 0, acc, negative_slope * acc).astype(out_ref.dtype)


def fuse_embeddings2_pallas(user_embed, poi_embed, third_embed, weight, bias,
                            *, negative_slope=0.2, block_n=None):
    """user/poi/third: (..., D_u/D_p/D_t); weight: (E, E) (PyTorch (out,in)); bias: (E,)."""
    du = user_embed.shape[-1]
    dp = poi_embed.shape[-1]
    dt = third_embed.shape[-1]
    embed_dim = du + dp + dt
    assert weight.shape == (embed_dim, embed_dim)
    assert bias.shape == (embed_dim,)

    lead = user_embed.shape[:-1]
    n = math.prod(lead) if lead else 1

    u2 = user_embed.reshape(n, du)
    p2 = poi_embed.reshape(n, dp)
    t2 = third_embed.reshape(n, dt)

    # Split the (in, out)-layout weight so the concat is fused into the kernel.
    w_in_out = weight.T                                   # (E_in, E_out)
    w_u = w_in_out[:du]                                   # (du, E)
    w_p = w_in_out[du:du + dp]                            # (dp, E)
    w_t = w_in_out[du + dp:]                              # (dt, E)
    b2 = bias.reshape(1, embed_dim)

    if block_n is None:
        # Full batch for small N (keeps block == full dim, no padding); cap at 1024
        # rows (~1 MiB of f32 output per buffer at E=128) for large N.
        block_n = n if n <= 1024 else 1024
    grid = (pl.cdiv(n, block_n),)

    kernel = functools.partial(_fuse_kernel, negative_slope=negative_slope)

    out = pl.pallas_call(
        kernel,
        out_shape=jax.ShapeDtypeStruct((n, embed_dim), user_embed.dtype),
        grid=grid,
        in_specs=[
            pl.BlockSpec((block_n, du), lambda i: (i, 0)),
            pl.BlockSpec((block_n, dp), lambda i: (i, 0)),
            pl.BlockSpec((block_n, dt), lambda i: (i, 0)),
            pl.BlockSpec((du, embed_dim), lambda i: (0, 0)),
            pl.BlockSpec((dp, embed_dim), lambda i: (0, 0)),
            pl.BlockSpec((dt, embed_dim), lambda i: (0, 0)),
            pl.BlockSpec((1, embed_dim), lambda i: (0, 0)),
        ],
        out_specs=pl.BlockSpec((block_n, embed_dim), lambda i: (i, 0)),
        compiler_params=pltpu.CompilerParams(
            dimension_semantics=("parallel",)   # megacore sharding on v7x
        ),
    )(u2, p2, t2, w_u, w_p, w_t, b2)

    return out.reshape(*lead, embed_dim)


def fuse_embeddings2_reference(user_embed, poi_embed, third_embed, weight, bias,
                               negative_slope=0.2):
    x = jnp.concatenate([user_embed, poi_embed, third_embed], axis=-1)
    y = jnp.matmul(x, weight.T) + bias
    return jnp.where(y >= 0, y, negative_slope * y)


if __name__ == "__main__":
    key = jax.random.PRNGKey(0)
    k_u, k_p, k_t, k_w, k_b = jax.random.split(key, 5)

    # FuseEmbeddings2(user_embed_dim=32, poi_embed_dim=64, third_embed_dim=32)
    user_dim, poi_dim, third_dim = 32, 64, 32
    embed_dim = user_dim + poi_dim + third_dim          # 128 -> lane-dense output
    batch, seq = 2, 8                                   # leading dims get flattened

    user_embed = jax.random.normal(k_u, (batch, seq, user_dim), dtype=jnp.float32)
    poi_embed = jax.random.normal(k_p, (batch, seq, poi_dim), dtype=jnp.float32)
    third_embed = jax.random.normal(k_t, (batch, seq, third_dim), dtype=jnp.float32)

    # nn.Linear(embed_dim, embed_dim) parameters (PyTorch layout: weight (out, in)).
    bound = 1.0 / math.sqrt(embed_dim)
    weight = jax.random.uniform(k_w, (embed_dim, embed_dim), jnp.float32, -bound, bound)
    bias = jax.random.uniform(k_b, (embed_dim,), jnp.float32, -bound, bound)

    out = fuse_embeddings2_pallas(user_embed, poi_embed, third_embed, weight, bias)
    out = jax.block_until_ready(out)

    ref = fuse_embeddings2_reference(user_embed, poi_embed, third_embed, weight, bias)
    assert out.shape == (batch, seq, embed_dim)
    assert jnp.allclose(out, ref, atol=1e-5, rtol=1e-5), "mismatch vs reference"

    print("KERNEL_OK")
</pallas_src>

<mosaic_0001>
module attributes {stable_mosaic.version = 11 : i64} {
  func.func @_fuse_kernel(%arg0: i32, %arg1: memref<16x32xf32, #tpu.memory_space<vmem>>, %arg2: memref<16x64xf32, #tpu.memory_space<vmem>>, %arg3: memref<16x32xf32, #tpu.memory_space<vmem>>, %arg4: memref<32x128xf32, #tpu.memory_space<vmem>>, %arg5: memref<64x128xf32, #tpu.memory_space<vmem>>, %arg6: memref<32x128xf32, #tpu.memory_space<vmem>>, %arg7: memref<1x128xf32, #tpu.memory_space<vmem>>, %arg8: memref<16x128xf32, #tpu.memory_space<vmem>>) attributes {dimension_semantics = [#tpu.dimension_semantics<parallel>], iteration_bounds = array<i64: 1>, scalar_prefetch = 0 : i64, scratch_operands = 0 : i64, tpu.core_type = #tpu.core_type<tc>, window_params = [{transform_indices = @transform_0, window_bounds = array<i64: 16, 32>}, {transform_indices = @transform_1, window_bounds = array<i64: 16, 64>}, {transform_indices = @transform_2, window_bounds = array<i64: 16, 32>}, {pipeline_mode = #tpu.pipeline_mode<synchronous>, transform_indices = @transform_3, window_bounds = array<i64: 32, 128>}, {pipeline_mode = #tpu.pipeline_mode<synchronous>, transform_indices = @transform_4, window_bounds = array<i64: 64, 128>}, {pipeline_mode = #tpu.pipeline_mode<synchronous>, transform_indices = @transform_5, window_bounds = array<i64: 32, 128>}, {pipeline_mode = #tpu.pipeline_mode<synchronous>, transform_indices = @transform_6, window_bounds = array<i64: 1, 128>}, {transform_indices = @transform_7, window_bounds = array<i64: 16, 128>}]} {
    %c0 = arith.constant 0 : index
    %c0_0 = arith.constant 0 : index
    %0 = vector.load %arg1[%c0, %c0_0] : memref<16x32xf32, #tpu.memory_space<vmem>>, vector<16x32xf32>
    %c0_1 = arith.constant 0 : index
    %c0_2 = arith.constant 0 : index
    %1 = vector.load %arg4[%c0_1, %c0_2] : memref<32x128xf32, #tpu.memory_space<vmem>>, vector<32x128xf32>
    %cst = arith.constant dense<0.000000e+00> : vector<16x128xf32>
    %2 = tpu.matmul %0, %1, %cst {dimension_numbers = #tpu.dot_dimension_numbers<[1], [0], [0], [1], [0, 0, 1, 1], [], []>} : vector<16x32xf32>, vector<32x128xf32>, vector<16x128xf32> -> vector<16x128xf32>
    %c0_3 = arith.constant 0 : index
    %c0_4 = arith.constant 0 : index
    %3 = vector.load %arg2[%c0_3, %c0_4] : memref<16x64xf32, #tpu.memory_space<vmem>>, vector<16x64xf32>
    %c0_5 = arith.constant 0 : index
    %c0_6 = arith.constant 0 : index
    %4 = vector.load %arg5[%c0_5, %c0_6] : memref<64x128xf32, #tpu.memory_space<vmem>>, vector<64x128xf32>
    %cst_7 = arith.constant dense<0.000000e+00> : vector<16x128xf32>
    %5 = tpu.matmul %3, %4, %cst_7 {dimension_numbers = #tpu.dot_dimension_numbers<[1], [0], [0], [1], [0, 0, 1, 1], [], []>} : vector<16x64xf32>, vector<64x128xf32>, vector<16x128xf32> -> vector<16x128xf32>
    %6 = arith.addf %2, %5 : vector<16x128xf32>
    %c0_8 = arith.constant 0 : index
    %c0_9 = arith.constant 0 : index
    %7 = vector.load %arg3[%c0_8, %c0_9] : memref<16x32xf32, #tpu.memory_space<vmem>>, vector<16x32xf32>
    %c0_10 = arith.constant 0 : index
    %c0_11 = arith.constant 0 : index
    %8 = vector.load %arg6[%c0_10, %c0_11] : memref<32x128xf32, #tpu.memory_space<vmem>>, vector<32x128xf32>
    %cst_12 = arith.constant dense<0.000000e+00> : vector<16x128xf32>
    %9 = tpu.matmul %7, %8, %cst_12 {dimension_numbers = #tpu.dot_dimension_numbers<[1], [0], [0], [1], [0, 0, 1, 1], [], []>} : vector<16x32xf32>, vector<32x128xf32>, vector<16x128xf32> -> vector<16x128xf32>
    %10 = arith.addf %6, %9 : vector<16x128xf32>
    %c0_13 = arith.constant 0 : index
    %c0_14 = arith.constant 0 : index
    %11 = vector.load %arg7[%c0_13, %c0_14] : memref<1x128xf32, #tpu.memory_space<vmem>>, vector<1x128xf32>
    %12 = vector.broadcast %11 : vector<1x128xf32> to vector<16x128xf32>
    %13 = arith.addf %10, %12 : vector<16x128xf32>
    %cst_15 = arith.constant 0.000000e+00 : f32
    %14 = vector.broadcast %cst_15 : f32 to vector<16x128xf32>
    %15 = arith.cmpf oge, %13, %14 : vector<16x128xf32>
    %cst_16 = arith.constant 2.000000e-01 : f32
    %16 = vector.broadcast %cst_16 : f32 to vector<16x128xf32>
    %17 = arith.mulf %16, %13 : vector<16x128xf32>
    %18 = arith.select %15, %13, %17 : vector<16x128xi1>, vector<16x128xf32>
    %c0_17 = arith.constant 0 : index
    %c0_18 = arith.constant 0 : index
    %19 = vector.load %arg8[%c0_17, %c0_18] : memref<16x128xf32, #tpu.memory_space<vmem>>, vector<16x128xf32>
    tpu.vector_store %arg8[%c0_17, %c0_18], %18 {strides = array<i32>} : memref<16x128xf32, #tpu.memory_space<vmem>>, vector<16x128xf32>,
    return
  }
  func.func @transform_0(%arg0: i32) -> (i32, i32) {
    %c0_i32 = arith.constant 0 : i32
    %c0_i32_0 = arith.constant 0 : i32
    return %arg0, %c0_i32 : i32, i32
  }
  func.func @transform_1(%arg0: i32) -> (i32, i32) {
    %c0_i32 = arith.constant 0 : i32
    %c0_i32_0 = arith.constant 0 : i32
    return %arg0, %c0_i32 : i32, i32
  }
  func.func @transform_2(%arg0: i32) -> (i32, i32) {
    %c0_i32 = arith.constant 0 : i32
    %c0_i32_0 = arith.constant 0 : i32
    return %arg0, %c0_i32 : i32, i32
  }
  func.func @transform_3(%arg0: i32) -> (i32, i32) {
    %c0_i32 = arith.constant 0 : i32
    %c0_i32_0 = arith.constant 0 : i32
    %c0_i32_1 = arith.constant 0 : i32
    return %c0_i32, %c0_i32_0 : i32, i32
  }
  func.func @transform_4(%arg0: i32) -> (i32, i32) {
    %c0_i32 = arith.constant 0 : i32
    %c0_i32_0 = arith.constant 0 : i32
    %c0_i32_1 = arith.constant 0 : i32
    return %c0_i32, %c0_i32_0 : i32, i32
  }
  func.func @transform_5(%arg0: i32) -> (i32, i32) {
    %c0_i32 = arith.constant 0 : i32
    %c0_i32_0 = arith.constant 0 : i32
    %c0_i32_1 = arith.constant 0 : i32
    return %c0_i32, %c0_i32_0 : i32, i32
  }
  func.func @transform_6(%arg0: i32) -> (i32, i32) {
    %c0_i32 = arith.constant 0 : i32
    %c0_i32_0 = arith.constant 0 : i32
    %c0_i32_1 = arith.constant 0 : i32
    return %c0_i32, %c0_i32_0 : i32, i32
  }
  func.func @transform_7(%arg0: i32) -> (i32, i32) {
    %c0_i32 = arith.constant 0 : i32
    %c0_i32_0 = arith.constant 0 : i32
    return %arg0, %c0_i32 : i32, i32
  }
}

</mosaic_0001>

<llo_original>
// kernel: tpu_custom_call.1
$region0: #{tpu_custom_call.1}
  #allocation0 [shape = 'u32[]', space=smem, size = 0x4, offset = 0x4, fixed_abs, tag = 'smem constant byte address 0x4 - core index']
  #allocation1 [shape = 'u32[144,128]{1,0:T(1,128)}', space=vmem, size = 0x12000, scoped, tag = 'internal scratch']
  %s0 = inlined_call_operand.hbm [shape: f32[16,32], index: 0, kind: input, shape index: {}]
  %s1 = inlined_call_operand.hbm [shape: f32[16,64], index: 1, kind: input, shape index: {}]
  %s2 = inlined_call_operand.hbm [shape: f32[16,32], index: 2, kind: input, shape index: {}]
  %s3 = inlined_call_operand.hbm [shape: f32[32,128], index: 3, kind: input, shape index: {}]
  %s4 = inlined_call_operand.hbm [shape: f32[64,128], index: 4, kind: input, shape index: {}]
  %s5 = inlined_call_operand.hbm [shape: f32[32,128], index: 5, kind: input, shape index: {}]
  %s6 = inlined_call_operand.vmem [shape: f32[1,128], index: 6, kind: input, shape index: {}]
  %s7 = inlined_call_operand.hbm [shape: f32[16,128], index: 7, kind: output, shape index: {}]
  %s8 = sld [smem:[#allocation0]]
  $region62: #{tpu_custom_call.1} parent=0
    _
  %s10 = ssub.s32 1, %s8
  %s11 = scalar_select 0, %s10, %s8
  $region1: #{tpu_custom_call.1} parent=0
    #allocation2 [shape = 'u8[8192]{0}', space=vmem, size = 0x2000, scoped, tag = 'input window, operand 0, single buffered']
    #allocation3 [shape = 's32[1]{0}', space=sflag, size = 0x4, scoped, tag = 'scoped memory for tpu_custom_call.1']
    #allocation4 [shape = 's32[1]{0}', space=sflag, size = 0x4, scoped, tag = 'scoped memory for tpu_custom_call.1']
    #allocation5 [shape = 'u8[8192]{0}', space=vmem, size = 0x2000, scoped, tag = 'input window, operand 1, single buffered']
    #allocation6 [shape = 's32[1]{0}', space=sflag, size = 0x4, scoped, tag = 'scoped memory for tpu_custom_call.1']
    #allocation7 [shape = 'u8[8192]{0}', space=vmem, size = 0x2000, scoped, tag = 'input window, operand 2, single buffered']
    #allocation8 [shape = 'u8[16384]{0}', space=vmem, size = 0x4000, scoped, tag = 'input window, operand 3, single buffered']
    #allocation9 [shape = 's32[1]{0}', space=sflag, size = 0x4, scoped, tag = 'scoped memory for tpu_custom_call.1']
    #allocation10 [shape = 'u8[32768]{0}', space=vmem, size = 0x8000, scoped, tag = 'input window, operand 4, single buffered']
    #allocation11 [shape = 'u8[16384]{0}', space=vmem, size = 0x4000, scoped, tag = 'input window, operand 5, single buffered']
    #allocation12 [shape = 's32[1]{0}', space=sflag, size = 0x4, scoped, tag = 'scoped memory for tpu_custom_call.1']
    #allocation13 [shape = 'u8[8192]{0}', space=vmem, size = 0x2000, scoped, tag = 'output window, operand 0, single buffered']
    %12 = vsyncpa [#allocation3], 0
    %13 = vsyncpa [#allocation6], 0
    %14 = vsyncpa [#allocation9], 0
    %15 = vsyncpa [#allocation12], 0
    %16 = vsyncpa [#allocation4], 0
    // Predicated region
    $region2: #{tpu_custom_call.1} parent=1 // pred_check
      _
    $region3: #{tpu_custom_call.1} parent=1 // pred_check_branch
      %18 = sbr.rel (0) target = $region5
    $region4: #{tpu_custom_call.1} parent=1 // pred_region
      %s20 = ssub.s32 256, 256
      %21 = vsyncadd [#allocation3], %s20
      %s22 = sshll.u32 [#allocation2], 4
      %s23 = int_to_ptr.vmem [resolvable:$true] %s22
      %28 = dma.hbm_to_vmem [thread:$0]  %s0, 256, %s23, [#allocation3], 128, 128, 8
    $region5: #{tpu_custom_call.1} parent=1 // pred_fallthru
      _
    // Predicated region
    $region6: #{tpu_custom_call.1} parent=1 // pred_check
      _
    $region7: #{tpu_custom_call.1} parent=1 // pred_check_branch
      %30 = sbr.rel (0) target = $region9
    $region8: #{tpu_custom_call.1} parent=1 // pred_region
      %s32 = ssub.s32 256, 256
      %33 = vsyncadd [#allocation6], %s32
      %s34 = sshll.u32 [#allocation5], 4
      %s35 = int_to_ptr.vmem [resolvable:$true] %s34
      %40 = dma.hbm_to_vmem [thread:$0]  %s1, 256, %s35, [#allocation6], 128, 128, 8
    $region9: #{tpu_custom_call.1} parent=1 // pred_fallthru
      _
    // Predicated region
    $region10: #{tpu_custom_call.1} parent=1 // pred_check
      _
    $region11: #{tpu_custom_call.1} parent=1 // pred_check_branch
      %42 = sbr.rel (0) target = $region13
    $region12: #{tpu_custom_call.1} parent=1 // pred_region
      %s44 = ssub.s32 256, 256
      %45 = vsyncadd [#allocation6], %s44
      %s46 = sshll.u32 [#allocation7], 4
      %s47 = int_to_ptr.vmem [resolvable:$true] %s46
      %52 = dma.hbm_to_vmem [thread:$0]  %s2, 256, %s47, [#allocation6], 128, 128, 8
    $region13: #{tpu_custom_call.1} parent=1 // pred_fallthru
      _
    // Predicated region
    $region14: #{tpu_custom_call.1} parent=1 // pred_check
      _
    $region15: #{tpu_custom_call.1} parent=1 // pred_check_branch
      %54 = sbr.rel (0) target = $region17
    $region16: #{tpu_custom_call.1} parent=1 // pred_region
      %s56 = ssub.s32 512, 512
      %57 = vsyncadd [#allocation9], %s56
      %s58 = sshll.u32 [#allocation8], 4
      %s59 = int_to_ptr.vmem [resolvable:$true] %s58
      %64 = dma.hbm_to_vmem [thread:$0]  %s3, 512, %s59, [#allocation9], 128, 128, 8
    $region17: #{tpu_custom_call.1} parent=1 // pred_fallthru
      _
    // Predicated region
    $region18: #{tpu_custom_call.1} parent=1 // pred_check
      _
    $region19: #{tpu_custom_call.1} parent=1 // pred_check_branch
      %66 = sbr.rel (0) target = $region21
    $region20: #{tpu_custom_call.1} parent=1 // pred_region
      %s68 = ssub.s32 1024, 1024
      %69 = vsyncadd [#allocation9], %s68
      %s70 = sshll.u32 [#allocation10], 4
      %s71 = int_to_ptr.vmem [resolvable:$true] %s70
      %76 = dma.hbm_to_vmem [thread:$0]  %s4, 1024, %s71, [#allocation9], 128, 128, 8
    $region21: #{tpu_custom_call.1} parent=1 // pred_fallthru
      _
    // Predicated region
    $region22: #{tpu_custom_call.1} parent=1 // pred_check
      _
    $region23: #{tpu_custom_call.1} parent=1 // pred_check_branch
      %78 = sbr.rel (0) target = $region25
    $region24: #{tpu_custom_call.1} parent=1 // pred_region
      %s80 = ssub.s32 512, 512
      %81 = vsyncadd [#allocation12], %s80
      %s82 = sshll.u32 [#allocation11], 4
      %s83 = int_to_ptr.vmem [resolvable:$true] %s82
      %88 = dma.hbm_to_vmem [thread:$0]  %s5, 512, %s83, [#allocation12], 128, 128, 8
    $region25: #{tpu_custom_call.1} parent=1 // pred_fallthru
      _
    // Predicated region
    $region26: #{tpu_custom_call.1} parent=1 // pred_check
      _
    $region27: #{tpu_custom_call.1} parent=1 // pred_check_branch
      %90 = sbr.rel (0) target = $region29
    $region28: #{tpu_custom_call.1} parent=1 // pred_region
      _
    $region29: #{tpu_custom_call.1} parent=1 // pred_fallthru
      _
    // Predicated region
    $region30: #{tpu_custom_call.1} parent=1 // pred_check
      _
    $region31: #{tpu_custom_call.1} parent=1 // pred_check_branch
      %92 = sbr.rel (0) target = $region33
    $region32: #{tpu_custom_call.1} parent=1 // pred_region
      %93 = dma.done [#allocation3], 256
    $region33: #{tpu_custom_call.1} parent=1 // pred_fallthru
      _
    // Predicated region
    $region34: #{tpu_custom_call.1} parent=1 // pred_check
      _
    $region35: #{tpu_custom_call.1} parent=1 // pred_check_branch
      %95 = sbr.rel (0) target = $region37
    $region36: #{tpu_custom_call.1} parent=1 // pred_region
      %96 = dma.done [#allocation6], 256
    $region37: #{tpu_custom_call.1} parent=1 // pred_fallthru
      _
    // Predicated region
    $region38: #{tpu_custom_call.1} parent=1 // pred_check
      _
    $region39: #{tpu_custom_call.1} parent=1 // pred_check_branch
      %98 = sbr.rel (0) target = $region41
    $region40: #{tpu_custom_call.1} parent=1 // pred_region
      %99 = dma.done [#allocation6], 256
    $region41: #{tpu_custom_call.1} parent=1 // pred_fallthru
      _
    // Predicated region
    $region42: #{tpu_custom_call.1} parent=1 // pred_check
      _
    $region43: #{tpu_custom_call.1} parent=1 // pred_check_branch
      %101 = sbr.rel (0) target = $region45
    $region44: #{tpu_custom_call.1} parent=1 // pred_region
      %102 = dma.done [#allocation9], 512
    $region45: #{tpu_custom_call.1} parent=1 // pred_fallthru
      _
    // Predicated region
    $region46: #{tpu_custom_call.1} parent=1 // pred_check
      _
    $region47: #{tpu_custom_call.1} parent=1 // pred_check_branch
      %104 = sbr.rel (0) target = $region49
    $region48: #{tpu_custom_call.1} parent=1 // pred_region
      %105 = dma.done [#allocation9], 1024
    $region49: #{tpu_custom_call.1} parent=1 // pred_fallthru
      _
    // Predicated region
    $region50: #{tpu_custom_call.1} parent=1 // pred_check
      _
    $region51: #{tpu_custom_call.1} parent=1 // pred_check_branch
      %107 = sbr.rel (0) target = $region53
    $region52: #{tpu_custom_call.1} parent=1 // pred_region
      %108 = dma.done [#allocation12], 512
    $region53: #{tpu_custom_call.1} parent=1 // pred_fallthru
      _
    %v109 = vld [vmem:[#allocation2] sm:$0xff]
    %v110 = vld [vmem:[#allocation2 + $0x8] sm:$0xff]
    %v111 = vld [vmem:[#allocation8] sm:$0xff]
    %v112 = vld [vmem:[#allocation8 + $0x8] sm:$0xff]
    %v113 = vld [vmem:[#allocation8 + $0x10] sm:$0xff]
    %v114 = vld [vmem:[#allocation8 + $0x18] sm:$0xff]
    %v115 = vld [vmem:[#allocation5] sm:$0xff]
    %v116 = vld [vmem:[#allocation5 + $0x8] sm:$0xff]
    %v117 = vld [vmem:[#allocation10] sm:$0xff]
    %v118 = vld [vmem:[#allocation10 + $0x8] sm:$0xff]
    %v119 = vld [vmem:[#allocation10 + $0x10] sm:$0xff]
    %v120 = vld [vmem:[#allocation10 + $0x18] sm:$0xff]
    %v121 = vld [vmem:[#allocation10 + $0x20] sm:$0xff]
    %v122 = vld [vmem:[#allocation10 + $0x28] sm:$0xff]
    %v123 = vld [vmem:[#allocation10 + $0x30] sm:$0xff]
    %v124 = vld [vmem:[#allocation10 + $0x38] sm:$0xff]
    %vm125 = vcmask 523264
    %v127 = vsel %vm125, %v115, 0
    %v130 = vsel %vm125, %v116, 0
    %132 = vmatprep.subr.mxu0 0.0
    %133 = vmatpush1.msra.mxu0 %v117
    %134 = vmatprep.subr.mxu0 0.0
    %135 = vmatpush1.msra.mxu0 %v118
    %136 = vmatprep.subr.mxu0 0.0
    %137 = vmatpush1.msra.mxu0 %v119
    %138 = vmatprep.subr.mxu0 0.0
    %139 = vmatpush1.msra.mxu0 %v120
    %140 = vmatprep.subr.mxu0 0.0
    %141 = vmatpush1.msra.mxu0 %v121
    %142 = vmatprep.subr.mxu0 0.0
    %143 = vmatpush1.msra.mxu0 %v122
    %144 = vmatprep.subr.mxu0 0.0
    %145 = vmatpush1.msra.mxu0 %v123
    %146 = vmatprep.subr.mxu0 0.0
    %147 = vmatpush1.msra.mxu0 %v124
    %148 = vmatprep.subr.mxu0 0.0
    %149 = vmatpush1.msra.mxu0 0.0
    %150 = vmatprep.subr.mxu0 0.0
    %151 = vmatpush1.msra.mxu0 0.0
    %152 = vmatprep.subr.mxu0 0.0
    %153 = vmatpush1.msra.mxu0 0.0
    %154 = vmatprep.subr.mxu0 0.0
    %155 = vmatpush1.msra.mxu0 0.0
    %156 = vmatprep.subr.mxu0 0.0
    %157 = vmatpush1.msra.mxu0 0.0
    %158 = vmatprep.subr.mxu0 0.0
    %159 = vmatpush1.msra.mxu0 0.0
    %160 = vmatprep.subr.mxu0 0.0
    %161 = vmatpush1.msra.mxu0 0.0
    %162 = vmatprep.subr.mxu0 0.0
    %163 = vmatpush1.msra.mxu0 0.0
    %164 = vmatprep.subr.mxu0 0.0
    %165 = vmatpush1.msra.mxu0 0.0
    %166 = vmatprep.subr.mxu0 0.0
    %167 = vmatpush1.msra.mxu0 0.0
    %168 = vmatprep.subr.mxu0 0.0
    %169 = vmatpush1.msra.mxu0 0.0
    %170 = vmatprep.subr.mxu0 0.0
    %171 = vmatpush1.msra.mxu0 0.0
    %172 = vmatprep.subr.mxu0 0.0
    %173 = vmatpush1.msra.mxu0 0.0
    %174 = vmatprep.subr.mxu0 0.0
    %175 = vmatpush1.msra.mxu0 0.0
    %176 = vmatprep.subr.mxu0 0.0
    %177 = vmatpush1.msra.mxu0 0.0
    %178 = vmatprep.subr.mxu0 0.0
    %179 = vmatpush1.msra.mxu0 0.0
    %180 = vmatprep.subr.mxu0 0.0
    %181 = vmatpush1.msra.mxu0 0.0
    %182 = vmatprep.subr.mxu0 0.0
    %183 = vmatpush1.msra.mxu0 0.0
    %184 = vmatprep.subr.mxu0 0.0
    %185 = vmatpush1.msra.mxu0 0.0
    %186 = vmatprep.subr.mxu0 0.0
    %187 = vmatpush1.msra.mxu0 0.0
    %188 = vmatprep.subr.mxu0 0.0
    %189 = vmatpush1.msra.mxu0 0.0
    %190 = vmatprep.subr.mxu0 0.0
    %191 = vmatpush1.msra.mxu0 0.0
    %192 = vmatprep.subr.mxu0 0.0
    %193 = vmatpush1.msra.mxu0 0.0
    %194 = vmatprep.subr.mxu0 0.0
    %195 = vmatpush1.msra.mxu0 0.0
    %196 = vmatprep.mubr.f32.mxu0 0.0
    %197 = vmatmul.mubr.f32.gmra.mrb[0].mxu0 %v127
    %v198 = vpop.f32.mrb[0].mxu0
    %v199 = vadd.f32 0.0, %v198
    %v200 = vpop.f32.mrb[0].mxu0
    %201 = vmatprep.mubr.f32.mxu0 0.0
    %202 = vmatmul.mubr.f32.gmra.mrb[0].mxu0 %v130
    %v203 = vpop.f32.mrb[0].mxu0
    %v204 = vadd.f32 0.0, %v203
    %v205 = vpop.f32.mrb[0].mxu0
    %206 = vdwg.mxu0
    %vm207 = vcmask 261120
    %v209 = vsel %vm207, %v109, 0
    %v212 = vsel %vm207, %v110, 0
    %214 = vmatprep.subr.mxu0 0.0
    %215 = vmatpush1.msra.mxu0 %v111
    %216 = vmatprep.subr.mxu0 0.0
    %217 = vmatpush1.msra.mxu0 %v112
    %218 = vmatprep.subr.mxu0 0.0
    %219 = vmatpush1.msra.mxu0 %v113
    %220 = vmatprep.subr.mxu0 0.0
    %221 = vmatpush1.msra.mxu0 %v114
    %222 = vmatprep.subr.mxu0 0.0
    %223 = vmatpush1.msra.mxu0 0.0
    %224 = vmatprep.subr.mxu0 0.0
    %225 = vmatpush1.msra.mxu0 0.0
    %226 = vmatprep.subr.mxu0 0.0
    %227 = vmatpush1.msra.mxu0 0.0
    %228 = vmatprep.subr.mxu0 0.0
    %229 = vmatpush1.msra.mxu0 0.0
    %230 = vmatprep.subr.mxu0 0.0
    %231 = vmatpush1.msra.mxu0 0.0
    %232 = vmatprep.subr.mxu0 0.0
    %233 = vmatpush1.msra.mxu0 0.0
    %234 = vmatprep.subr.mxu0 0.0
    %235 = vmatpush1.msra.mxu0 0.0
    %236 = vmatprep.subr.mxu0 0.0
    %237 = vmatpush1.msra.mxu0 0.0
    %238 = vmatprep.subr.mxu0 0.0
    %239 = vmatpush1.msra.mxu0 0.0
    %240 = vmatprep.subr.mxu0 0.0
    %241 = vmatpush1.msra.mxu0 0.0
    %242 = vmatprep.subr.mxu0 0.0
    %243 = vmatpush1.msra.mxu0 0.0
    %244 = vmatprep.subr.mxu0 0.0
    %245 = vmatpush1.msra.mxu0 0.0
    %246 = vmatprep.subr.mxu0 0.0
    %247 = vmatpush1.msra.mxu0 0.0
    %248 = vmatprep.subr.mxu0 0.0
    %249 = vmatpush1.msra.mxu0 0.0
    %250 = vmatprep.subr.mxu0 0.0
    %251 = vmatpush1.msra.mxu0 0.0
    %252 = vmatprep.subr.mxu0 0.0
    %253 = vmatpush1.msra.mxu0 0.0
    %254 = vmatprep.subr.mxu0 0.0
    %255 = vmatpush1.msra.mxu0 0.0
    %256 = vmatprep.subr.mxu0 0.0
    %257 = vmatpush1.msra.mxu0 0.0
    %258 = vmatprep.subr.mxu0 0.0
    %259 = vmatpush1.msra.mxu0 0.0
    %260 = vmatprep.subr.mxu0 0.0
    %261 = vmatpush1.msra.mxu0 0.0
    %262 = vmatprep.subr.mxu0 0.0
    %263 = vmatpush1.msra.mxu0 0.0
    %264 = vmatprep.subr.mxu0 0.0
    %265 = vmatpush1.msra.mxu0 0.0
    %266 = vmatprep.subr.mxu0 0.0
    %267 = vmatpush1.msra.mxu0 0.0
    %268 = vmatprep.subr.mxu0 0.0
    %269 = vmatpush1.msra.mxu0 0.0
    %270 = vmatprep.subr.mxu0 0.0
    %271 = vmatpush1.msra.mxu0 0.0
    %272 = vmatprep.subr.mxu0 0.0
    %273 = vmatpush1.msra.mxu0 0.0
    %274 = vmatprep.subr.mxu0 0.0
    %275 = vmatpush1.msra.mxu0 0.0
    %276 = vmatprep.subr.mxu0 0.0
    %277 = vmatpush1.msra.mxu0 0.0
    %278 = vmatprep.mubr.f32.mxu0 0.0
    %279 = vmatmul.mubr.f32.gmra.mrb[0].mxu0 %v209
    %v280 = vpop.f32.mrb[0].mxu0
    %v281 = vadd.f32 %v199, %v280
    %v282 = vpop.f32.mrb[0].mxu0
    %283 = vmatprep.mubr.f32.mxu0 0.0
    %284 = vmatmul.mubr.f32.gmra.mrb[0].mxu0 %v212
    %v285 = vpop.f32.mrb[0].mxu0
    %v286 = vadd.f32 %v204, %v285
    %v287 = vpop.f32.mrb[0].mxu0
    %288 = vdwg.mxu0
    %v289 = vld [vmem:[#allocation7] sm:$0xff]
    %v290 = vld [vmem:[#allocation7 + $0x8] sm:$0xff]
    %v291 = vld [vmem:[#allocation11] sm:$0xff]
    %v292 = vld [vmem:[#allocation11 + $0x8] sm:$0xff]
    %v293 = vld [vmem:[#allocation11 + $0x10] sm:$0xff]
    %v294 = vld [vmem:[#allocation11 + $0x18] sm:$0xff]
    %v296 = vsel %vm207, %v289, 0
    %v299 = vsel %vm207, %v290, 0
    %301 = vmatprep.subr.mxu0 0.0
    %302 = vmatpush1.msra.mxu0 %v291
    %303 = vmatprep.subr.mxu0 0.0
    %304 = vmatpush1.msra.mxu0 %v292
    %305 = vmatprep.subr.mxu0 0.0
    %306 = vmatpush1.msra.mxu0 %v293
    %307 = vmatprep.subr.mxu0 0.0
    %308 = vmatpush1.msra.mxu0 %v294
    %309 = vmatprep.subr.mxu0 0.0
    %310 = vmatpush1.msra.mxu0 0.0
    %311 = vmatprep.subr.mxu0 0.0
    %312 = vmatpush1.msra.mxu0 0.0
    %313 = vmatprep.subr.mxu0 0.0
    %314 = vmatpush1.msra.mxu0 0.0
    %315 = vmatprep.subr.mxu0 0.0
    %316 = vmatpush1.msra.mxu0 0.0
    %317 = vmatprep.subr.mxu0 0.0
    %318 = vmatpush1.msra.mxu0 0.0
    %319 = vmatprep.subr.mxu0 0.0
    %320 = vmatpush1.msra.mxu0 0.0
    %321 = vmatprep.subr.mxu0 0.0
    %322 = vmatpush1.msra.mxu0 0.0
    %323 = vmatprep.subr.mxu0 0.0
    %324 = vmatpush1.msra.mxu0 0.0
    %325 = vmatprep.subr.mxu0 0.0
    %326 = vmatpush1.msra.mxu0 0.0
    %327 = vmatprep.subr.mxu0 0.0
    %328 = vmatpush1.msra.mxu0 0.0
    %329 = vmatprep.subr.mxu0 0.0
    %330 = vmatpush1.msra.mxu0 0.0
    %331 = vmatprep.subr.mxu0 0.0
    %332 = vmatpush1.msra.mxu0 0.0
    %333 = vmatprep.subr.mxu0 0.0
    %334 = vmatpush1.msra.mxu0 0.0
    %335 = vmatprep.subr.mxu0 0.0
    %336 = vmatpush1.msra.mxu0 0.0
    %337 = vmatprep.subr.mxu0 0.0
    %338 = vmatpush1.msra.mxu0 0.0
    %339 = vmatprep.subr.mxu0 0.0
    %340 = vmatpush1.msra.mxu0 0.0
    %341 = vmatprep.subr.mxu0 0.0
    %342 = vmatpush1.msra.mxu0 0.0
    %343 = vmatprep.subr.mxu0 0.0
    %344 = vmatpush1.msra.mxu0 0.0
    %345 = vmatprep.subr.mxu0 0.0
    %346 = vmatpush1.msra.mxu0 0.0
    %347 = vmatprep.subr.mxu0 0.0
    %348 = vmatpush1.msra.mxu0 0.0
    %349 = vmatprep.subr.mxu0 0.0
    %350 = vmatpush1.msra.mxu0 0.0
    %351 = vmatprep.subr.mxu0 0.0
    %352 = vmatpush1.msra.mxu0 0.0
    %353 = vmatprep.subr.mxu0 0.0
    %354 = vmatpush1.msra.mxu0 0.0
    %355 = vmatprep.subr.mxu0 0.0
    %356 = vmatpush1.msra.mxu0 0.0
    %357 = vmatprep.subr.mxu0 0.0
    %358 = vmatpush1.msra.mxu0 0.0
    %359 = vmatprep.subr.mxu0 0.0
    %360 = vmatpush1.msra.mxu0 0.0
    %361 = vmatprep.subr.mxu0 0.0
    %362 = vmatpush1.msra.mxu0 0.0
    %363 = vmatprep.subr.mxu0 0.0
    %364 = vmatpush1.msra.mxu0 0.0
    %365 = vmatprep.mubr.f32.mxu0 0.0
    %366 = vmatmul.mubr.f32.gmra.mrb[0].mxu0 %v296
    %v367 = vpop.f32.mrb[0].mxu0
    %v368 = vadd.f32 0.0, %v367
    %v369 = vpop.f32.mrb[0].mxu0
    %370 = vmatprep.mubr.f32.mxu0 0.0
    %371 = vmatmul.mubr.f32.gmra.mrb[0].mxu0 %v299
    %v372 = vpop.f32.mrb[0].mxu0
    %v373 = vadd.f32 0.0, %v372
    %v374 = vpop.f32.mrb[0].mxu0
    %375 = vdwg.mxu0
    %v376 = vadd.f32 %v281, %v368
    %v377 = vadd.f32 %v286, %v373
    %v378 = vld [vmem:[%s6] sm:$0x1]
    %v380 = vlaneseq
    %v381 = vshrl.u32 %v380, 7
    %v382 = vsub.s32 0, %v381
    %v383 = vrot.slane %v378, %v382
    %v385 = vadd.f32 %v376, %v383
    %v386 = vadd.f32 %v377, %v383
    %vm387 = vcmp.ge.f32.partialorder %v385, 0.0
    %vm388 = vcmp.ge.f32.partialorder %v386, 0.0
    %v389 = vmul.f32 %v385, 0.2
    %v390 = vmul.f32 %v386, 0.2
    %v391 = vsel %vm387, %v385, %v389
    %v392 = vsel %vm388, %v386, %v390
    %393 = vst [vmem:[#allocation13] sm:$0xff] %v391
    %394 = vst [vmem:[#allocation13 + $0x8] sm:$0xff] %v392
    // Predicated region
    $region54: #{tpu_custom_call.1} parent=1 // pred_check
      _
    $region55: #{tpu_custom_call.1} parent=1 // pred_check_branch
      %396 = sbr.rel (0) target = $region57
    $region56: #{tpu_custom_call.1} parent=1 // pred_region
      %s398 = ssub.s32 256, 256
      %399 = vsyncadd [#allocation4], %s398
      %s400 = sshll.u32 [#allocation13], 4
      %s401 = int_to_ptr.vmem [resolvable:$true] %s400
      %406 = dma.vmem_to_hbm [thread:$0]  %s401, 256, %s7, [#allocation4], 128, 128, 8
    $region57: #{tpu_custom_call.1} parent=1 // pred_fallthru
      _
    // Predicated region
    $region58: #{tpu_custom_call.1} parent=1 // pred_check
      _
    $region59: #{tpu_custom_call.1} parent=1 // pred_check_branch
      %408 = sbr.rel (0) target = $region61
    $region60: #{tpu_custom_call.1} parent=1 // pred_region
      %409 = dma.done [#allocation4], 256
    $region61: #{tpu_custom_call.1} parent=1 // pred_fallthru
      _
    %410 = vsyncpa [#allocation3], 1
    %411 = vsyncpa [#allocation6], 1
    %412 = vsyncpa [#allocation9], 1
    %413 = vsyncpa [#allocation12], 1
    %414 = vsyncpa [#allocation4], 1

</llo_original>
